<compile_context>
chip_gen: v7x
topology: tpu7x:2x2x1
jax: 0.10.0
libtpu: 0.0.40
codegen_flags: <defaults>
</compile_context>

<pallas_src>
import jax
import jax.numpy as jnp
from jax import lax
from jax.experimental import pallas as pl
from jax.experimental.pallas import tpu as pltpu


def _round_up(x: int, m: int) -> int:
    return ((x + m - 1) // m) * m


def _masked_linear_kernel_f32out(x_ref, w_ref, b_ref, o_ref):
    """f32 output: accumulate directly into the resident output tile.

    x_ref: (tm, tk)  activations tile (compute dtype)
    w_ref: (tn, tk)  pre-masked weight tile, nn.Linear (Out, In) layout
    b_ref: (1,  tn)  f32 bias tile
    o_ref: (tm, tn)  f32 output tile, resident across the K grid axis
    """
    k = pl.program_id(2)
    part = lax.dot_general(
        x_ref[...],
        w_ref[...],
        dimension_numbers=(((1,), (1,)), ((), ())),   # contract K of both; no transpose
        preferred_element_type=jnp.float32,
    )

    @pl.when(k == 0)
    def _():
        o_ref[...] = part + b_ref[...]

    @pl.when(k > 0)
    def _():
        o_ref[...] += part


def _masked_linear_kernel_acc(x_ref, w_ref, b_ref, o_ref, acc_ref):
    """Non-f32 output: f32 VMEM accumulator, single cast on the last K step."""
    k = pl.program_id(2)
    part = lax.dot_general(
        x_ref[...],
        w_ref[...],
        dimension_numbers=(((1,), (1,)), ((), ())),
        preferred_element_type=jnp.float32,
    )

    @pl.when(k == 0)
    def _():
        acc_ref[...] = part

    @pl.when(k > 0)
    def _():
        acc_ref[...] += part

    @pl.when(k == pl.num_programs(2) - 1)
    def _():
        o_ref[...] = (acc_ref[...] + b_ref[...]).astype(o_ref.dtype)


def _choose_tiles(B, Out, K, compute_dtype, tm, tn, tk):
    """Pick (8/16,128)-aligned tiles; clamp caller-supplied values."""
    m_align = 16 if jnp.dtype(compute_dtype).itemsize < 4 else 8
    user_tn = tn is not None

    if tm is None:
        tm = min(_round_up(B, m_align), 512)
    else:
        tm = _round_up(max(int(tm), m_align), m_align)
    if tn is None:
        tn = min(_round_up(Out, 128), 512)
    else:
        tn = _round_up(max(int(tn), 128), 128)
    if tk is None:
        tk = min(_round_up(K, 128), 2048)
    else:
        tk = _round_up(max(int(tk), 128), 128)

    # v7x has 2 TensorCores; dimension_semantics only shards the parallel axes,
    # so make sure they have >= 2 steps when the layer is big enough to split.
    if (not user_tn and tn > 128
            and (_round_up(B, tm) // tm) * (_round_up(Out, tn) // tn) < 2):
        tn = 128

    return tm, tn, tk


def masked_linear(inputs, weight, mask, bias, cond_inputs=None, cond_weight=None,
                  *, compute_dtype=jnp.bfloat16, tm=None, tn=None, tk=None):
    """Pallas implementation of MaskedLinear.forward.

    inputs:       (B, In)
    weight, mask: (Out, In)   (nn.Linear layout)
    bias:         (Out,)
    cond_inputs:  (B, CIn) or None
    cond_weight:  (Out, CIn) or None
    returns:      (B, Out) in inputs.dtype
    """
    B, In = inputs.shape
    Out = weight.shape[0]
    out_dtype = inputs.dtype
    compute_dtype = jnp.dtype(compute_dtype)

    # Weight-side prep.  The mask is a structural constant: for inference hoist
    # this per layer; under jax.jit XLA fuses mask-mul/concat/pad/cast into one
    # weight-sized pass so the kernel's single weight stream stays dominant.
    w = (weight * mask).astype(compute_dtype)
    x = inputs.astype(compute_dtype)
    if cond_inputs is not None:
        # Fuse the conditional matmul into the same contraction (K = In + CIn).
        x = jnp.concatenate([x, cond_inputs.astype(compute_dtype)], axis=1)
        w = jnp.concatenate([w, cond_weight.astype(compute_dtype)], axis=1)
    K = x.shape[1]

    tm, tn, tk = _choose_tiles(B, Out, K, compute_dtype, tm, tn, tk)

    # Zero-pad to tile multiples (padding contributes 0 to the accumulation;
    # padded output rows/cols are sliced away).
    Mp, Np, Kp = _round_up(B, tm), _round_up(Out, tn), _round_up(K, tk)
    x_p = jnp.pad(x, ((0, Mp - B), (0, Kp - K)))
    w_p = jnp.pad(w, ((0, Np - Out), (0, Kp - K)))
    b_p = jnp.pad(bias.astype(jnp.float32), (0, Np - Out)).reshape(1, Np)

    grid = (Mp // tm, Np // tn, Kp // tk)
    n_k = grid[2]

    # 3-deep pipeline on the big weight DMA once there are enough K steps to
    # benefit (hides exposed DMA when per-tile compute is small).
    if n_k >= 3:
        w_spec = pl.BlockSpec((tn, tk), lambda i, j, k: (j, k),
                              pipeline_mode=pl.Buffered(3))
        n_wbuf = 3
    else:
        w_spec = pl.BlockSpec((tn, tk), lambda i, j, k: (j, k))
        n_wbuf = 2

    use_direct = jnp.dtype(out_dtype) == jnp.float32
    kernel = _masked_linear_kernel_f32out if use_direct else _masked_linear_kernel_acc
    scratch = [] if use_direct else [pltpu.VMEM((tm, tn), jnp.float32)]

    cb = compute_dtype.itemsize
    ob = jnp.dtype(out_dtype).itemsize

    # VMEM budget (double-buffered inputs/outputs + weight multi-buffer + acc),
    # capped at 48 MiB so a v6e-tuned config can never blow v7x's 64 MiB.
    vmem_est = (2 * tm * tk * cb + n_wbuf * tn * tk * cb + 2 * 8 * tn * 4
                + 2 * tm * tn * ob + (0 if use_direct else tm * tn * 4))
    vmem_limit = int(min(max(2 * vmem_est, 32 << 20), 48 << 20))

    out_padded = pl.pallas_call(
        kernel,
        out_shape=jax.ShapeDtypeStruct((Mp, Np), out_dtype),
        grid_spec=pltpu.PrefetchScalarGridSpec(
            num_scalar_prefetch=0,
            grid=grid,
            in_specs=[
                pl.BlockSpec((tm, tk), lambda i, j, k: (i, k)),  # activations
                w_spec,                                          # masked weight
                pl.BlockSpec((1, tn), lambda i, j, k: (0, j)),   # bias (f32)
            ],
            out_specs=pl.BlockSpec((tm, tn), lambda i, j, k: (i, j)),
            scratch_shapes=scratch,
        ),
        compiler_params=pltpu.CompilerParams(
            dimension_semantics=("parallel", "parallel", "arbitrary"),
            vmem_limit_bytes=vmem_limit,
        ),
        cost_estimate=pl.CostEstimate(
            flops=2 * Mp * Np * Kp,
            transcendentals=0,
            bytes_accessed=int(x_p.size * cb + w_p.size * cb
                               + b_p.size * 4 + Mp * Np * ob),
        ),
    )(x_p, w_p, b_p)

    return out_padded[:B, :Out]


def _made_mask(in_features, out_features, in_flow_features):
    """Standard MADE-style mask (same construction as the repo's get_mask)."""
    in_degrees = jnp.arange(in_features) % in_flow_features
    out_degrees = jnp.arange(out_features) % in_flow_features
    return (out_degrees[:, None] >= in_degrees[None, :]).astype(jnp.float32)


if __name__ == "__main__":
    key = jax.random.PRNGKey(0)
    k_x, k_w, k_b, k_cx, k_cw, k_x2, k_w2, k_b2 = jax.random.split(key, 8)

    # jit the whole wrapper so the weight prep fuses into one pass (perf note).
    mlin = jax.jit(masked_linear,
                   static_argnames=("compute_dtype", "tm", "tn", "tk"))

    def q(a):  # bf16-quantize, back to f32 (what the default path streams)
        return a.astype(jnp.bfloat16).astype(jnp.float32)

    # ---- Test 1: small MADE layer with conditional inputs -------------------
    B, In, Out, CIn = 8, 32, 32, 16
    bw, bc = 1.0 / In ** 0.5, 1.0 / CIn ** 0.5
    x = jax.random.normal(k_x, (B, In), jnp.float32)
    weight = jax.random.uniform(k_w, (Out, In), jnp.float32, -bw, bw)
    bias = jax.random.uniform(k_b, (Out,), jnp.float32, -bw, bw)
    cond_x = jax.random.normal(k_cx, (B, CIn), jnp.float32)
    cond_w = jax.random.uniform(k_cw, (Out, CIn), jnp.float32, -bc, bc)
    mask = _made_mask(In, Out, in_flow_features=4)
    wm = weight * mask

    # Default fast path: bf16 streaming, f32 accumulation.
    out = jax.block_until_ready(mlin(x, weight, mask, bias, cond_x, cond_w))
    ref = q(x) @ q(wm).T + bias + q(cond_x) @ q(cond_w).T
    assert out.shape == (B, Out)
    assert jnp.allclose(out, ref, atol=2e-3, rtol=2e-3), "mismatch (bf16 path)"

    # Exact f32 compute path (no conditional inputs).
    out_f32 = jax.block_until_ready(
        mlin(x, weight, mask, bias, compute_dtype=jnp.float32))
    ref_f32 = x @ wm.T + bias
    assert jnp.allclose(out_f32, ref_f32, atol=1e-5, rtol=1e-5), "mismatch (f32 path)"

    # ---- Test 2: multi-K-step accumulation + 3-deep weight pipeline ---------
    B2, In2, Out2 = 16, 400, 160
    bw2 = 1.0 / In2 ** 0.5
    x2 = jax.random.normal(k_x2, (B2, In2), jnp.float32)
    w2 = jax.random.uniform(k_w2, (Out2, In2), jnp.float32, -bw2, bw2)
    b2 = jax.random.uniform(k_b2, (Out2,), jnp.float32, -bw2, bw2)
    mask2 = _made_mask(In2, Out2, in_flow_features=5)
    wm2 = w2 * mask2

    out2 = jax.block_until_ready(mlin(x2, w2, mask2, b2, tk=128))
    ref2 = q(x2) @ q(wm2).T + b2
    assert out2.shape == (B2, Out2)
    assert jnp.allclose(out2, ref2, atol=5e-3, rtol=5e-3), "mismatch (multi-K)"

    # ---- Test 3: bf16 output -> f32-accumulator kernel variant --------------
    x2b = x2.astype(jnp.bfloat16)
    out3 = jax.block_until_ready(mlin(x2b, w2, mask2, b2, tk=128))
    assert out3.dtype == jnp.bfloat16
    assert jnp.allclose(out3.astype(jnp.float32), ref2, atol=2e-2, rtol=2e-2), \
        "mismatch (bf16-out path)"

    print("KERNEL_OK")
</pallas_src>

<mosaic_0001>
module attributes {stable_mosaic.version = 11 : i64} {
  func.func @_masked_linear_kernel_f32out(%arg0: i32, %arg1: i32, %arg2: i32, %arg3: memref<16x128xbf16, #tpu.memory_space<vmem>>, %arg4: memref<128x128xbf16, #tpu.memory_space<vmem>>, %arg5: memref<1x128xf32, #tpu.memory_space<vmem>>, %arg6: memref<16x128xf32, #tpu.memory_space<vmem>>) attributes {dimension_semantics = [#tpu.dimension_semantics<parallel>, #tpu.dimension_semantics<parallel>, #tpu.dimension_semantics<arbitrary>], iteration_bounds = array<i64: 1, 1, 1>, scalar_prefetch = 0 : i64, scratch_operands = 0 : i64, tpu.core_type = #tpu.core_type<tc>, window_params = [{transform_indices = @transform_0, window_bounds = array<i64: 16, 128>}, {transform_indices = @transform_1, window_bounds = array<i64: 128, 128>}, {transform_indices = @transform_2, window_bounds = array<i64: 1, 128>}, {transform_indices = @transform_3, window_bounds = array<i64: 16, 128>}]} {
    %c0 = arith.constant 0 : index
    %c0_0 = arith.constant 0 : index
    %0 = vector.load %arg3[%c0, %c0_0] : memref<16x128xbf16, #tpu.memory_space<vmem>>, vector<16x128xbf16>
    %c0_1 = arith.constant 0 : index
    %c0_2 = arith.constant 0 : index
    %1 = vector.load %arg4[%c0_1, %c0_2] : memref<128x128xbf16, #tpu.memory_space<vmem>>, vector<128x128xbf16>
    %cst = arith.constant dense<0.000000e+00> : vector<16x128xf32>
    %2 = tpu.matmul %0, %1, %cst {dimension_numbers = #tpu.dot_dimension_numbers<[1], [1], [0], [0], [0, 0, 1, 0], [], []>} : vector<16x128xbf16>, vector<128x128xbf16>, vector<16x128xf32> -> vector<16x128xf32>
    %c0_i32 = arith.constant 0 : i32
    %3 = arith.cmpi eq, %arg2, %c0_i32 : i32
    %4 = arith.extui %3 : i1 to i32
    %c0_i32_3 = arith.constant 0 : i32
    %5 = arith.cmpi ne, %4, %c0_i32_3 : i32
    scf.if %5 {
      %c0_6 = arith.constant 0 : index
      %c0_7 = arith.constant 0 : index
      %9 = vector.load %arg5[%c0_6, %c0_7] : memref<1x128xf32, #tpu.memory_space<vmem>>, vector<1x128xf32>
      %10 = vector.broadcast %9 : vector<1x128xf32> to vector<16x128xf32>
      %11 = arith.addf %2, %10 : vector<16x128xf32>
      %c0_8 = arith.constant 0 : index
      %c0_9 = arith.constant 0 : index
      %12 = vector.load %arg6[%c0_8, %c0_9] : memref<16x128xf32, #tpu.memory_space<vmem>>, vector<16x128xf32>
      tpu.vector_store %arg6[%c0_8, %c0_9], %11 {strides = array<i32>} : memref<16x128xf32, #tpu.memory_space<vmem>>, vector<16x128xf32>,
    } else {
    }
    %c0_i32_4 = arith.constant 0 : i32
    %6 = arith.cmpi sgt, %arg2, %c0_i32_4 : i32
    %7 = arith.extui %6 : i1 to i32
    %c0_i32_5 = arith.constant 0 : i32
    %8 = arith.cmpi ne, %7, %c0_i32_5 : i32
    scf.if %8 {
      %c0_6 = arith.constant 0 : index
      %c0_7 = arith.constant 0 : index
      %9 = vector.load %arg6[%c0_6, %c0_7] : memref<16x128xf32, #tpu.memory_space<vmem>>, vector<16x128xf32>
      %10 = arith.addf %9, %2 : vector<16x128xf32>
      %c0_8 = arith.constant 0 : index
      %c0_9 = arith.constant 0 : index
      %11 = vector.load %arg6[%c0_8, %c0_9] : memref<16x128xf32, #tpu.memory_space<vmem>>, vector<16x128xf32>
      tpu.vector_store %arg6[%c0_8, %c0_9], %10 {strides = array<i32>} : memref<16x128xf32, #tpu.memory_space<vmem>>, vector<16x128xf32>,
    } else {
    }
    return
  }
  func.func @transform_0(%arg0: i32, %arg1: i32, %arg2: i32) -> (i32, i32) {
    %c0_i32 = arith.constant 0 : i32
    return %arg0, %arg2 : i32, i32
  }
  func.func @transform_1(%arg0: i32, %arg1: i32, %arg2: i32) -> (i32, i32) {
    %c0_i32 = arith.constant 0 : i32
    return %arg1, %arg2 : i32, i32
  }
  func.func @transform_2(%arg0: i32, %arg1: i32, %arg2: i32) -> (i32, i32) {
    %c0_i32 = arith.constant 0 : i32
    %c0_i32_0 = arith.constant 0 : i32
    return %c0_i32, %arg1 : i32, i32
  }
  func.func @transform_3(%arg0: i32, %arg1: i32, %arg2: i32) -> (i32, i32) {
    %c0_i32 = arith.constant 0 : i32
    return %arg0, %arg1 : i32, i32
  }
}

</mosaic_0001>

<llo_original>
// kernel: masked_linear.1
$region0: #{masked_linear.1}
  #allocation0 [shape = 'u32[]', space=smem, size = 0x4, offset = 0x4, fixed_abs, tag = 'smem constant byte address 0x4 - core index']
  #allocation1 [shape = 'u32[144,128]{1,0:T(1,128)}', space=vmem, size = 0x12000, scoped, tag = 'internal scratch']
  %s0 = inlined_call_operand.vmem [shape: bf16[16,128], index: 0, kind: input, shape index: {}]
  %s1 = inlined_call_operand.vmem [shape: bf16[128,128], index: 1, kind: input, shape index: {}]
  %s2 = inlined_call_operand.vmem [shape: f32[1,128], index: 2, kind: input, shape index: {}]
  %s3 = inlined_call_operand.vmem [shape: f32[16,128], index: 3, kind: output, shape index: {}]
  %s4 = sld [smem:[#allocation0]]
  $region30: #{masked_linear.1} parent=0
    _
  %s6 = ssub.s32 1, %s4
  %s7 = scalar_select 0, %s6, %s4
  // Predicated region
  $region2: #{masked_linear.1} parent=0 // pred_check
    _
  $region3: #{masked_linear.1} parent=0 // pred_check_branch
    %9 = sbr.rel (0) target = $region5
  $region4: #{masked_linear.1} parent=0 // pred_region
    _
  $region5: #{masked_linear.1} parent=0 // pred_fallthru
    _
  // Predicated region
  $region6: #{masked_linear.1} parent=0 // pred_check
    _
  $region7: #{masked_linear.1} parent=0 // pred_check_branch
    %11 = sbr.rel (0) target = $region9
  $region8: #{masked_linear.1} parent=0 // pred_region
    _
  $region9: #{masked_linear.1} parent=0 // pred_fallthru
    _
  // Predicated region
  $region10: #{masked_linear.1} parent=0 // pred_check
    _
  $region11: #{masked_linear.1} parent=0 // pred_check_branch
    %13 = sbr.rel (0) target = $region13
  $region12: #{masked_linear.1} parent=0 // pred_region
    _
  $region13: #{masked_linear.1} parent=0 // pred_fallthru
    _
  %v15 = vld [vmem:[%s0] sm:$0xf]
  %v16 = vld [vmem:[%s0 + $0x4] sm:$0xf]
  %v17 = vld [vmem:[%s1] sm:$0xf]
  %v18 = vld [vmem:[%s1 + $0x4] sm:$0xf]
  %v19 = vld [vmem:[%s1 + $0x8] sm:$0xf]
  %v20 = vld [vmem:[%s1 + $0xc] sm:$0xf]
  %v21 = vld [vmem:[%s1 + $0x10] sm:$0xf]
  %v22 = vld [vmem:[%s1 + $0x14] sm:$0xf]
  %v23 = vld [vmem:[%s1 + $0x18] sm:$0xf]
  %v24 = vld [vmem:[%s1 + $0x1c] sm:$0xf]
  %v25 = vld [vmem:[%s1 + $0x20] sm:$0xf]
  %v26 = vld [vmem:[%s1 + $0x24] sm:$0xf]
  %v27 = vld [vmem:[%s1 + $0x28] sm:$0xf]
  %v28 = vld [vmem:[%s1 + $0x2c] sm:$0xf]
  %v29 = vld [vmem:[%s1 + $0x30] sm:$0xf]
  %v30 = vld [vmem:[%s1 + $0x34] sm:$0xf]
  %v31 = vld [vmem:[%s1 + $0x38] sm:$0xf]
  %v32 = vld [vmem:[%s1 + $0x3c] sm:$0xf]
  %v35 = vunpack.c.l.b16 %v15
  %v36 = vunpack.c.l.b16 %v16
  %v37 = vpack.c.b16 %v36, %v35
  %v55 = vunpack.c.l.b16 %v17
  %v56 = vunpack.c.l.b16 %v18
  %v57 = vunpack.c.l.b16 %v19
  %v58 = vunpack.c.l.b16 %v20
  %v59 = vunpack.c.l.b16 %v21
  %v60 = vunpack.c.l.b16 %v22
  %v61 = vunpack.c.l.b16 %v23
  %v62 = vunpack.c.l.b16 %v24
  %v63 = vunpack.c.l.b16 %v25
  %v64 = vunpack.c.l.b16 %v26
  %v65 = vunpack.c.l.b16 %v27
  %v66 = vunpack.c.l.b16 %v28
  %v67 = vunpack.c.l.b16 %v29
  %v68 = vunpack.c.l.b16 %v30
  %v69 = vunpack.c.l.b16 %v31
  %v70 = vunpack.c.l.b16 %v32
  %v71 = vpack.c.b16 %v56, %v55
  %v72 = vpack.c.b16 %v58, %v57
  %v73 = vpack.c.b16 %v60, %v59
  %v74 = vpack.c.b16 %v62, %v61
  %v75 = vpack.c.b16 %v64, %v63
  %v76 = vpack.c.b16 %v66, %v65
  %v77 = vpack.c.b16 %v68, %v67
  %v78 = vpack.c.b16 %v70, %v69
  %87 = vmatprep.subr.bf16.mxu0 0
  %88 = vmatpush1.bf16.xpose.msra.mxu0 %v71
  %89 = vmatprep.subr.bf16.mxu0 0
  %90 = vmatpush1.bf16.xpose.msra.mxu0 %v72
  %91 = vmatprep.subr.bf16.mxu0 0
  %92 = vmatpush1.bf16.xpose.msra.mxu0 %v73
  %93 = vmatprep.subr.bf16.mxu0 0
  %94 = vmatpush1.bf16.xpose.msra.mxu0 %v74
  %95 = vmatprep.subr.bf16.mxu0 0
  %96 = vmatpush1.bf16.xpose.msra.mxu0 %v75
  %97 = vmatprep.subr.bf16.mxu0 0
  %98 = vmatpush1.bf16.xpose.msra.mxu0 %v76
  %99 = vmatprep.subr.bf16.mxu0 0
  %100 = vmatpush1.bf16.xpose.msra.mxu0 %v77
  %101 = vmatprep.subr.bf16.mxu0 0
  %102 = vmatpush1.bf16.xpose.msra.mxu0 %v78
  %103 = vmatprep.subr.bf16.mxu0 0
  %104 = vmatpush1.bf16.xpose.msra.mxu0 0
  %105 = vmatprep.subr.bf16.mxu0 0
  %106 = vmatpush1.bf16.xpose.msra.mxu0 0
  %107 = vmatprep.subr.bf16.mxu0 0
  %108 = vmatpush1.bf16.xpose.msra.mxu0 0
  %109 = vmatprep.subr.bf16.mxu0 0
  %110 = vmatpush1.bf16.xpose.msra.mxu0 0
  %111 = vmatprep.subr.bf16.mxu0 0
  %112 = vmatpush1.bf16.xpose.msra.mxu0 0
  %113 = vmatprep.subr.bf16.mxu0 0
  %114 = vmatpush1.bf16.xpose.msra.mxu0 0
  %115 = vmatprep.subr.bf16.mxu0 0
  %116 = vmatpush1.bf16.xpose.msra.mxu0 0
  %117 = vmatprep.subr.bf16.mxu0 0
  %118 = vmatpush1.bf16.xpose.msra.mxu0 0
  %119 = vmatprep.mubr.bf16.mxu0 0
  %120 = vmatmul.mubr.bf16.gmra.mrb[0].mxu0 %v37
  %v121 = vpop.f32.mrb[0].mxu0
  %v122 = vadd.f32 0.0, %v121
  %v123 = vpop.f32.mrb[0].mxu0
  %v124 = vpop.f32.mrb[0].mxu0
  %v125 = vadd.f32 0.0, %v124
  %v126 = vpop.f32.mrb[0].mxu0
  %127 = vdwg.mxu0
  %p128 = scmp.eq.s32.totalorder 0, 0
  // Predicated region
  $region14: #{masked_linear.1} parent=0 // pred_check
    %p129 = pneg %p128
  $region15: #{masked_linear.1} parent=0 // pred_check_branch
    %131 = sbr.rel (%p129) target = $region17
  $region16: #{masked_linear.1} parent=0 // pred_region
    %v132 = vld [vmem:[%s2] sm:$0x1]
    %v134 = vlaneseq
    %v135 = vshrl.u32 %v134, 7
    %v136 = vsub.s32 0, %v135
    %v137 = vrot.slane %v132, %v136
    %v139 = vadd.f32 %v122, %v137
    %v140 = vadd.f32 %v125, %v137
    %141 = vst [vmem:[%s3] sm:$0xff] %v139
    %142 = vst [vmem:[%s3 + $0x8] sm:$0xff] %v140
  $region17: #{masked_linear.1} parent=0 // pred_fallthru
    _
  %p143 = scmp.gt.s32.totalorder 0, 0
  // Predicated region
  $region18: #{masked_linear.1} parent=0 // pred_check
    %p144 = pneg %p143
  $region19: #{masked_linear.1} parent=0 // pred_check_branch
    %146 = sbr.rel (%p144) target = $region21
  $region20: #{masked_linear.1} parent=0 // pred_region
    %v147 = vld [vmem:[%s3] sm:$0xff]
    %v148 = vld [vmem:[%s3 + $0x8] sm:$0xff]
    %v149 = vadd.f32 %v147, %v122
    %v150 = vadd.f32 %v148, %v125
    %151 = vst [vmem:[%s3] sm:$0xff] %v149
    %152 = vst [vmem:[%s3 + $0x8] sm:$0xff] %v150
  $region21: #{masked_linear.1} parent=0 // pred_fallthru
    _
  // Predicated region
  $region22: #{masked_linear.1} parent=0 // pred_check
    _
  $region23: #{masked_linear.1} parent=0 // pred_check_branch
    %154 = sbr.rel (0) target = $region25
  $region24: #{masked_linear.1} parent=0 // pred_region
    _
  $region25: #{masked_linear.1} parent=0 // pred_fallthru
    _
  // Predicated region
  $region26: #{masked_linear.1} parent=0 // pred_check
    _
  $region27: #{masked_linear.1} parent=0 // pred_check_branch
    %156 = sbr.rel (0) target = $region29
  $region28: #{masked_linear.1} parent=0 // pred_region
    _
  $region29: #{masked_linear.1} parent=0 // pred_fallthru
    _

</llo_original>
